<compile_context>
chip_gen: v5e
topology: v5e:2x2
jax: 0.10.0
libtpu: 0.0.40
codegen_flags: <defaults>
</compile_context>

<pallas_src>
import jax
import jax.numpy as jnp
from jax.experimental import pallas as pl
from jax.experimental.pallas import tpu as pltpu


_LANE = 512          # last-dim width; multiple of 128 -> lane-dense vregs
_TILE_ROWS = 1024    # 1024 * 512 * 4 B = 2 MiB per array per block


def _focal_loss_kernel(pred_ref, gt_ref, out_ref):
    pred = pred_ref[...]
    gt = gt_ref[...]

    is_pos = gt == 1.0

    # pos branch: -log(pred)     * (1 - pred)^2
    # neg branch: -log(1 - pred) * pred^2 * (1 - gt)^4    (only where gt < 1)
    # The branches are mutually exclusive, so select the log argument once
    # (one EUP push per element instead of two).
    q = jnp.where(is_pos, pred, 1.0 - pred)
    one_minus_q = 1.0 - q                      # (1-pred) for pos, pred for neg
    focal = one_minus_q * one_minus_q

    one_minus_gt = 1.0 - gt
    sq = one_minus_gt * one_minus_gt
    neg_w = sq * sq                            # (1 - gt)^4 with two muls
    # gt == 1 -> 1 ; gt < 1 -> (1-gt)^4 ; gt > 1 -> 0 (matches the reference
    # where such elements are neither pos nor neg).
    weight = jnp.where(is_pos, 1.0, jnp.where(gt < 1.0, neg_w, 0.0))

    out_ref[...] = -jnp.log(q) * focal * weight


def focal_loss(pred, gt):
    """Per-element modified focal loss, same semantics as _neg_loss.

    pred, gt: (B, C, H, W) float32. Returns (B, C, H, W) float32.
    """
    assert pred.shape == gt.shape
    orig_shape = pred.shape
    dtype = pred.dtype
    n = pred.size

    rows = pl.cdiv(n, _LANE)
    # Tile row count: multiple of 8 (sublane), capped at _TILE_ROWS.
    tile_rows = min(_TILE_ROWS, ((rows + 7) // 8) * 8)
    padded_rows = pl.cdiv(rows, tile_rows) * tile_rows
    padded_n = padded_rows * _LANE

    pred_flat = pred.reshape(-1)
    gt_flat = gt.reshape(-1)
    if padded_n != n:
        pad = padded_n - n
        # Benign pad values: pred = 0.5, gt = 0 keep padded lanes finite.
        pred_flat = jnp.concatenate(
            [pred_flat, jnp.full((pad,), 0.5, dtype=dtype)])
        gt_flat = jnp.concatenate(
            [gt_flat, jnp.zeros((pad,), dtype=gt.dtype)])

    pred2d = pred_flat.reshape(padded_rows, _LANE)
    gt2d = gt_flat.reshape(padded_rows, _LANE)

    grid = (padded_rows // tile_rows,)

    out2d = pl.pallas_call(
        _focal_loss_kernel,
        out_shape=jax.ShapeDtypeStruct((padded_rows, _LANE), dtype),
        grid=grid,
        in_specs=[
            pl.BlockSpec((tile_rows, _LANE), lambda i: (i, 0)),
            pl.BlockSpec((tile_rows, _LANE), lambda i: (i, 0)),
        ],
        out_specs=pl.BlockSpec((tile_rows, _LANE), lambda i: (i, 0)),
        compiler_params=pltpu.CompilerParams(
            dimension_semantics=("parallel",),
        ),
    )(pred2d, gt2d)

    out = out2d.reshape(-1)
    if padded_n != n:
        out = out[:n]
    return out.reshape(orig_shape)


def _focal_loss_ref(pred, gt):
    pos_inds = (gt == 1.0).astype(pred.dtype)
    neg_inds = (gt < 1.0).astype(pred.dtype)
    neg_weights = jnp.power(1.0 - gt, 4)
    pos_loss = jnp.log(pred) * jnp.power(1.0 - pred, 2) * pos_inds
    neg_loss = jnp.log(1.0 - pred) * jnp.power(pred, 2) * neg_weights * neg_inds
    return -(pos_loss + neg_loss)


if __name__ == "__main__":
    key = jax.random.PRNGKey(0)
    k1, k2, k3 = jax.random.split(key, 3)

    B, C, H, W = 2, 4, 16, 16

    # Predictions in (0, 1) (as they would come out of a sigmoid head).
    pred = jax.nn.sigmoid(jax.random.normal(k1, (B, C, H, W), dtype=jnp.float32))
    pred = jnp.clip(pred, 1e-4, 1.0 - 1e-4)

    # Gaussian-heatmap-like target in [0, 1), with some entries set exactly to
    # 1 (positive centers), like CenterPoint targets.
    gt = jax.random.uniform(k2, (B, C, H, W), dtype=jnp.float32, maxval=0.999)
    pos_mask = jax.random.bernoulli(k3, p=0.02, shape=(B, C, H, W))
    gt = jnp.where(pos_mask, jnp.float32(1.0), gt)

    out = focal_loss(pred, gt)
    out = jax.block_until_ready(out)

    ref = _focal_loss_ref(pred, gt)
    assert out.shape == (B, C, H, W)
    assert jnp.allclose(out, ref, atol=1e-5, rtol=1e-5)

    print("KERNEL_OK")
</pallas_src>

<mosaic_0001>
module attributes {stable_mosaic.version = 11 : i64} {
  func.func @_focal_loss_kernel(%arg0: i32, %arg1: memref<8x512xf32, #tpu.memory_space<vmem>>, %arg2: memref<8x512xf32, #tpu.memory_space<vmem>>, %arg3: memref<8x512xf32, #tpu.memory_space<vmem>>) attributes {dimension_semantics = [#tpu.dimension_semantics<parallel>], iteration_bounds = array<i64: 1>, scalar_prefetch = 0 : i64, scratch_operands = 0 : i64, tpu.core_type = #tpu.core_type<tc>, window_params = [{transform_indices = @transform_0, window_bounds = array<i64: 8, 512>}, {transform_indices = @transform_1, window_bounds = array<i64: 8, 512>}, {transform_indices = @transform_2, window_bounds = array<i64: 8, 512>}]} {
    %c0 = arith.constant 0 : index
    %c0_0 = arith.constant 0 : index
    %0 = vector.load %arg1[%c0, %c0_0] : memref<8x512xf32, #tpu.memory_space<vmem>>, vector<8x512xf32>
    %c0_1 = arith.constant 0 : index
    %c0_2 = arith.constant 0 : index
    %1 = vector.load %arg2[%c0_1, %c0_2] : memref<8x512xf32, #tpu.memory_space<vmem>>, vector<8x512xf32>
    %cst = arith.constant 1.000000e+00 : f32
    %2 = vector.broadcast %cst : f32 to vector<8x512xf32>
    %3 = arith.cmpf oeq, %1, %2 : vector<8x512xf32>
    %cst_3 = arith.constant 1.000000e+00 : f32
    %4 = vector.broadcast %cst_3 : f32 to vector<8x512xf32>
    %5 = arith.subf %4, %0 : vector<8x512xf32>
    %6 = arith.select %3, %0, %5 : vector<8x512xi1>, vector<8x512xf32>
    %cst_4 = arith.constant 1.000000e+00 : f32
    %7 = vector.broadcast %cst_4 : f32 to vector<8x512xf32>
    %8 = arith.subf %7, %6 : vector<8x512xf32>
    %9 = arith.mulf %8, %8 : vector<8x512xf32>
    %cst_5 = arith.constant 1.000000e+00 : f32
    %10 = vector.broadcast %cst_5 : f32 to vector<8x512xf32>
    %11 = arith.subf %10, %1 : vector<8x512xf32>
    %12 = arith.mulf %11, %11 : vector<8x512xf32>
    %13 = arith.mulf %12, %12 : vector<8x512xf32>
    %cst_6 = arith.constant 1.000000e+00 : f32
    %14 = vector.broadcast %cst_6 : f32 to vector<8x512xf32>
    %15 = arith.cmpf olt, %1, %14 : vector<8x512xf32>
    %cst_7 = arith.constant 0.000000e+00 : f32
    %16 = vector.broadcast %cst_7 : f32 to vector<8x512xf32>
    %17 = arith.select %15, %13, %16 : vector<8x512xi1>, vector<8x512xf32>
    %cst_8 = arith.constant 1.000000e+00 : f32
    %18 = vector.broadcast %cst_8 : f32 to vector<8x512xf32>
    %19 = arith.select %3, %18, %17 : vector<8x512xi1>, vector<8x512xf32>
    %20 = math.log %6 : vector<8x512xf32>
    %cst_9 = arith.constant 0.000000e+00 : f32
    %21 = vector.broadcast %cst_9 : f32 to vector<8x512xf32>
    %22 = arith.subf %21, %20 : vector<8x512xf32>
    %23 = arith.mulf %22, %9 : vector<8x512xf32>
    %24 = arith.mulf %23, %19 : vector<8x512xf32>
    %c0_10 = arith.constant 0 : index
    %c0_11 = arith.constant 0 : index
    %25 = vector.load %arg3[%c0_10, %c0_11] : memref<8x512xf32, #tpu.memory_space<vmem>>, vector<8x512xf32>
    tpu.vector_store %arg3[%c0_10, %c0_11], %24 {strides = array<i32>} : memref<8x512xf32, #tpu.memory_space<vmem>>, vector<8x512xf32>,
    return
  }
  func.func @transform_0(%arg0: i32) -> (i32, i32) {
    %c0_i32 = arith.constant 0 : i32
    %c0_i32_0 = arith.constant 0 : i32
    return %arg0, %c0_i32 : i32, i32
  }
  func.func @transform_1(%arg0: i32) -> (i32, i32) {
    %c0_i32 = arith.constant 0 : i32
    %c0_i32_0 = arith.constant 0 : i32
    return %arg0, %c0_i32 : i32, i32
  }
  func.func @transform_2(%arg0: i32) -> (i32, i32) {
    %c0_i32 = arith.constant 0 : i32
    %c0_i32_0 = arith.constant 0 : i32
    return %arg0, %c0_i32 : i32, i32
  }
}

</mosaic_0001>

<llo_original>
// kernel: tpu_custom_call.1
$region0: #{tpu_custom_call.1}
  #allocation0 [shape = 'u32[]', space=smem, size = 0x4, offset = 0x4, fixed_abs, tag = 'smem constant byte address 0x4 - core index']
  #allocation1 [shape = 'u32[72,128]{1,0:T(1,128)}', space=vmem, size = 0x9000, scoped, tag = 'internal scratch']
  %s0 = inlined_call_operand.hbm [shape: f32[8,512], index: 0, kind: input, shape index: {}]
  %s1 = inlined_call_operand.hbm [shape: f32[8,512], index: 1, kind: input, shape index: {}]
  %s2 = inlined_call_operand.hbm [shape: f32[8,512], index: 2, kind: output, shape index: {}]
  %s3 = sld [smem:[#allocation0]]
  $region26: #{tpu_custom_call.1} parent=0
    _
  %s5 = ssub.s32 1, %s3
  %s6 = scalar_select 0, %s5, %s3
  $region1: #{tpu_custom_call.1} parent=0
    #allocation2 [shape = 'u8[16384]{0}', space=vmem, size = 0x4000, scoped, tag = 'input window, operand 0, single buffered']
    #allocation3 [shape = 's32[1]{0}', space=sflag, size = 0x4, scoped, tag = 'scoped memory for tpu_custom_call.1']
    #allocation4 [shape = 's32[1]{0}', space=sflag, size = 0x4, scoped, tag = 'scoped memory for tpu_custom_call.1']
    #allocation5 [shape = 'u8[16384]{0}', space=vmem, size = 0x4000, scoped, tag = 'input window, operand 1, single buffered']
    #allocation6 [shape = 's32[1]{0}', space=sflag, size = 0x4, scoped, tag = 'scoped memory for tpu_custom_call.1']
    #allocation7 [shape = 'u8[16384]{0}', space=vmem, size = 0x4000, scoped, tag = 'output window, operand 0, single buffered']
    %7 = vsyncpa [#allocation3], 0
    %8 = vsyncpa [#allocation6], 0
    %9 = vsyncpa [#allocation4], 0
    // Predicated region
    $region2: #{tpu_custom_call.1} parent=1 // pred_check
      _
    $region3: #{tpu_custom_call.1} parent=1 // pred_check_branch
      %11 = sbr.rel (0) target = $region5
    $region4: #{tpu_custom_call.1} parent=1 // pred_region
      %13 = vsyncadd [#allocation3], 0
      %s15 = sshll.u32 %s0, 4
      %s16 = int_to_ptr.hbm [resolvable:$true] %s15
      %s17 = sshll.u32 [#allocation2], 4
      %s18 = int_to_ptr.vmem [resolvable:$true] %s17
      %20 = dma.hbm_to_vmem [thread:$0]  %s16, 512, %s18, [#allocation3]
    $region5: #{tpu_custom_call.1} parent=1 // pred_fallthru
      _
    // Predicated region
    $region6: #{tpu_custom_call.1} parent=1 // pred_check
      _
    $region7: #{tpu_custom_call.1} parent=1 // pred_check_branch
      %22 = sbr.rel (0) target = $region9
    $region8: #{tpu_custom_call.1} parent=1 // pred_region
      %24 = vsyncadd [#allocation6], 0
      %s26 = sshll.u32 %s1, 4
      %s27 = int_to_ptr.hbm [resolvable:$true] %s26
      %s28 = sshll.u32 [#allocation5], 4
      %s29 = int_to_ptr.vmem [resolvable:$true] %s28
      %31 = dma.hbm_to_vmem [thread:$0]  %s27, 512, %s29, [#allocation6]
    $region9: #{tpu_custom_call.1} parent=1 // pred_fallthru
      _
    // Predicated region
    $region10: #{tpu_custom_call.1} parent=1 // pred_check
      _
    $region11: #{tpu_custom_call.1} parent=1 // pred_check_branch
      %33 = sbr.rel (0) target = $region13
    $region12: #{tpu_custom_call.1} parent=1 // pred_region
      %35 = dma.done [#allocation3], 512
    $region13: #{tpu_custom_call.1} parent=1 // pred_fallthru
      _
    // Predicated region
    $region14: #{tpu_custom_call.1} parent=1 // pred_check
      _
    $region15: #{tpu_custom_call.1} parent=1 // pred_check_branch
      %37 = sbr.rel (0) target = $region17
    $region16: #{tpu_custom_call.1} parent=1 // pred_region
      %39 = dma.done [#allocation6], 512
    $region17: #{tpu_custom_call.1} parent=1 // pred_fallthru
      _
    %v40 = vld [vmem:[#allocation2] sm:$0xff]
    %v41 = vld [vmem:[#allocation2 + $0x8] sm:$0xff]
    %v42 = vld [vmem:[#allocation2 + $0x10] sm:$0xff]
    %v43 = vld [vmem:[#allocation2 + $0x18] sm:$0xff]
    %v44 = vld [vmem:[#allocation5] sm:$0xff]
    %v45 = vld [vmem:[#allocation5 + $0x8] sm:$0xff]
    %v46 = vld [vmem:[#allocation5 + $0x10] sm:$0xff]
    %v47 = vld [vmem:[#allocation5 + $0x18] sm:$0xff]
    %vm48 = vcmp.eq.f32.partialorder %v44, 1.0
    %vm49 = vcmp.eq.f32.partialorder %v45, 1.0
    %vm50 = vcmp.eq.f32.partialorder %v46, 1.0
    %vm51 = vcmp.eq.f32.partialorder %v47, 1.0
    %v52 = vsub.f32 1.0, %v40
    %v53 = vsub.f32 1.0, %v41
    %v54 = vsub.f32 1.0, %v42
    %v55 = vsub.f32 1.0, %v43
    %v56 = vsel %vm48, %v40, %v52
    %v57 = vsel %vm49, %v41, %v53
    %v58 = vsel %vm50, %v42, %v54
    %v59 = vsel %vm51, %v43, %v55
    %v60 = vsub.f32 1.0, %v56
    %v61 = vsub.f32 1.0, %v57
    %v62 = vsub.f32 1.0, %v58
    %v63 = vsub.f32 1.0, %v59
    %v64 = vmul.f32 %v60, %v60
    %v65 = vmul.f32 %v61, %v61
    %v66 = vmul.f32 %v62, %v62
    %v67 = vmul.f32 %v63, %v63
    %v68 = vsub.f32 1.0, %v44
    %v69 = vsub.f32 1.0, %v45
    %v70 = vsub.f32 1.0, %v46
    %v71 = vsub.f32 1.0, %v47
    %v72 = vmul.f32 %v68, %v68
    %v73 = vmul.f32 %v69, %v69
    %v74 = vmul.f32 %v70, %v70
    %v75 = vmul.f32 %v71, %v71
    %v76 = vmul.f32 %v72, %v72
    %v77 = vmul.f32 %v73, %v73
    %v78 = vmul.f32 %v74, %v74
    %v79 = vmul.f32 %v75, %v75
    %vm80 = vcmp.lt.f32.partialorder %v44, 1.0
    %vm81 = vcmp.lt.f32.partialorder %v45, 1.0
    %vm82 = vcmp.lt.f32.partialorder %v46, 1.0
    %vm83 = vcmp.lt.f32.partialorder %v47, 1.0
    %v84 = vsel %vm80, %v76, 0.0
    %v85 = vsel %vm81, %v77, 0.0
    %v86 = vsel %vm82, %v78, 0.0
    %v87 = vsel %vm83, %v79, 0.0
    %v88 = vsel %vm48, 1.0, %v84
    %v89 = vsel %vm49, 1.0, %v85
    %v90 = vsel %vm50, 1.0, %v86
    %v91 = vsel %vm51, 1.0, %v87
    %v92 = vlog2.pop %v56
    %v93 = vmul.f32 %v92, 0.6931472
    %v94 = vlog2.pop %v57
    %v95 = vmul.f32 %v94, 0.6931472
    %v96 = vlog2.pop %v58
    %v97 = vmul.f32 %v96, 0.6931472
    %v98 = vlog2.pop %v59
    %v99 = vmul.f32 %v98, 0.6931472
    %v100 = vsub.f32 0.0, %v93
    %v101 = vsub.f32 0.0, %v95
    %v102 = vsub.f32 0.0, %v97
    %v103 = vsub.f32 0.0, %v99
    %v104 = vmul.f32 %v100, %v64
    %v105 = vmul.f32 %v101, %v65
    %v106 = vmul.f32 %v102, %v66
    %v107 = vmul.f32 %v103, %v67
    %v108 = vmul.f32 %v104, %v88
    %v109 = vmul.f32 %v105, %v89
    %v110 = vmul.f32 %v106, %v90
    %v111 = vmul.f32 %v107, %v91
    %112 = vst [vmem:[#allocation7] sm:$0xff] %v108
    %113 = vst [vmem:[#allocation7 + $0x8] sm:$0xff] %v109
    %114 = vst [vmem:[#allocation7 + $0x10] sm:$0xff] %v110
    %115 = vst [vmem:[#allocation7 + $0x18] sm:$0xff] %v111
    // Predicated region
    $region18: #{tpu_custom_call.1} parent=1 // pred_check
      _
    $region19: #{tpu_custom_call.1} parent=1 // pred_check_branch
      %117 = sbr.rel (0) target = $region21
    $region20: #{tpu_custom_call.1} parent=1 // pred_region
      %119 = vsyncadd [#allocation4], 0
      %s121 = sshll.u32 [#allocation7], 4
      %s122 = int_to_ptr.vmem [resolvable:$true] %s121
      %s123 = sshll.u32 %s2, 4
      %s124 = int_to_ptr.hbm [resolvable:$true] %s123
      %126 = dma.vmem_to_hbm [thread:$0]  %s122, 512, %s124, [#allocation4]
    $region21: #{tpu_custom_call.1} parent=1 // pred_fallthru
      _
    // Predicated region
    $region22: #{tpu_custom_call.1} parent=1 // pred_check
      _
    $region23: #{tpu_custom_call.1} parent=1 // pred_check_branch
      %128 = sbr.rel (0) target = $region25
    $region24: #{tpu_custom_call.1} parent=1 // pred_region
      %130 = dma.done [#allocation4], 512
    $region25: #{tpu_custom_call.1} parent=1 // pred_fallthru
      _
    %131 = vsyncpa [#allocation3], 1
    %132 = vsyncpa [#allocation6], 1
    %133 = vsyncpa [#allocation4], 1

</llo_original>
